<compile_context>
chip_gen: v5e
topology: v5e:2x2
jax: 0.10.0
libtpu: 0.0.40
codegen_flags: <defaults>
</compile_context>

<pallas_src>
import functools

import jax
import jax.numpy as jnp
from jax import lax
from jax.experimental import pallas as pl
from jax.experimental.pallas import tpu as pltpu


def _mlp_kernel(x_ref, w1_ref, b1_ref, w2_ref, b2_ref, w3_ref, b3_ref, o_ref):
    """One batch tile.

    x_ref : (TB, 8)   batch on sublanes as loaded from HBM
    w1: (64, 8)  b1: (64, 1)
    w2: (32, 64) b2: (32, 1)
    w3: (1, 32)  b3: (1, 1) [SMEM scalar]
    o_ref : (1, TB)   batch on lanes (lane-dense store)
    """
    x = x_ref[...]                                                  # (TB, 8)

    # Layer 1: h1[o, b] = sum_f w1[o, f] * x[b, f]  ->  (64, TB).
    # Contract the last dim of both operands so no explicit transpose of the
    # large activation block is materialized; result is batch-on-lanes.
    h1 = lax.dot_general(w1_ref[...], x,
                         dimension_numbers=(((1,), (1,)), ((), ())),
                         preferred_element_type=jnp.float32)        # (64, TB)
    h1 = jnp.maximum(h1 + b1_ref[...], 0.0)

    # Layer 2: Linear(64 -> 32) + ReLU
    h2 = jnp.dot(w2_ref[...], h1,
                 preferred_element_type=jnp.float32)                # (32, TB)
    h2 = jnp.maximum(h2 + b2_ref[...], 0.0)

    # Layer 3: Linear(32 -> 1), scalar bias from SMEM
    h3 = jnp.dot(w3_ref[...], h2,
                 preferred_element_type=jnp.float32)                # (1, TB)
    o_ref[...] = (h3 + b3_ref[0, 0]).astype(o_ref.dtype)


def _round_up(x, m):
    return ((x + m - 1) // m) * m


@functools.partial(jax.jit, static_argnames=("block_batch",))
def california_housing_forward(x, params, *, block_batch=8192):
    """x: (B, 8) float32. params: dict of w1,b1,w2,b2,w3,b3. Returns (B, 1)."""
    w1, b1 = params["w1"], params["b1"]        # (64, 8), (64, 1)
    w2, b2 = params["w2"], params["b2"]        # (32, 64), (32, 1)
    w3, b3 = params["w3"], params["b3"]        # (1, 32), (1, 1)

    B, F = x.shape
    assert F == 8, F

    x = x.astype(jnp.float32)

    # Pad batch only to a lane multiple (128); ragged last tiles are handled
    # by Pallas partial-block masking, so no padding to TB is needed.
    B_pad = _round_up(B, 128)
    if B_pad != B:
        x = jnp.pad(x, ((0, B_pad - B), (0, 0)))

    # Normalize the caller-supplied tile to a multiple of 128 and cap it.
    TB = min(max(128, _round_up(int(block_batch), 128)), B_pad)
    num_tiles = pl.cdiv(B_pad, TB)
    # v7x megacore: make sure the "parallel" axis has >= 2 tiles when the
    # padded batch allows it so both TensorCores get work.
    if num_tiles == 1 and B_pad >= 256:
        TB = _round_up(pl.cdiv(B_pad, 2), 128)
        num_tiles = pl.cdiv(B_pad, TB)

    # Full-array blocks with a constant index_map: DMA'd once, VMEM-resident.
    weight_spec = lambda a: pl.BlockSpec(a.shape, lambda i: (0, 0))

    out_t = pl.pallas_call(
        _mlp_kernel,
        out_shape=jax.ShapeDtypeStruct((1, B_pad), jnp.float32),
        grid=(num_tiles,),
        in_specs=[
            pl.BlockSpec((TB, F), lambda i: (i, 0)),               # x stream
            weight_spec(w1), weight_spec(b1),
            weight_spec(w2), weight_spec(b2),
            weight_spec(w3),
            pl.BlockSpec(memory_space=pltpu.MemorySpace.SMEM),     # b3 scalar
        ],
        out_specs=pl.BlockSpec((1, TB), lambda i: (0, i)),
        compiler_params=pltpu.CompilerParams(
            # Batch tiles are independent -> shard across v7x's 2 TCs.
            dimension_semantics=("parallel",),
        ),
    )(x, w1, b1, w2, b2, w3, b3)

    return out_t[0, :B].reshape(B, 1)


def init_params(key):
    """PyTorch nn.Linear default init (U(+/- 1/sqrt(fan_in))), stored in
    PyTorch-native (out_features, in_features) layout; biases as (out, 1)
    columns so they broadcast over the lane (batch) axis inside the kernel."""
    def linear(k, fan_in, fan_out):
        kw, kb = jax.random.split(k)
        bound = 1.0 / jnp.sqrt(float(fan_in))
        w = jax.random.uniform(kw, (fan_out, fan_in), jnp.float32, -bound, bound)
        b = jax.random.uniform(kb, (fan_out, 1), jnp.float32, -bound, bound)
        return w, b

    k1, k2, k3 = jax.random.split(key, 3)
    w1, b1 = linear(k1, 8, 64)
    w2, b2 = linear(k2, 64, 32)
    w3, b3 = linear(k3, 32, 1)
    return {"w1": w1, "b1": b1, "w2": w2, "b2": b2, "w3": w3, "b3": b3}


def reference_forward(x, p):
    # Reference at HIGHEST precision (true f32 values); kernel uses the
    # default MXU precision, hence the relaxed tolerance in the check below.
    hp = lax.Precision.HIGHEST
    h = jnp.maximum(jnp.dot(x, p["w1"].T, precision=hp) + p["b1"][:, 0], 0.0)
    h = jnp.maximum(jnp.dot(h, p["w2"].T, precision=hp) + p["b2"][:, 0], 0.0)
    return jnp.dot(h, p["w3"].T, precision=hp) + p["b3"][:, 0]


if __name__ == "__main__":
    key = jax.random.PRNGKey(0)
    k_params, k_x = jax.random.split(key)

    params = init_params(k_params)
    B = 8
    x = jax.random.normal(k_x, (B, 8), jnp.float32)

    out = california_housing_forward(x, params)
    out = jax.block_until_ready(out)

    ref = reference_forward(x, params)
    assert out.shape == (B, 1), out.shape
    assert jnp.allclose(out, ref, atol=5e-2, rtol=5e-2), (out, ref)

    print("KERNEL_OK")
</pallas_src>

<mosaic_0001>
module attributes {stable_mosaic.version = 11 : i64} {
  func.func @_mlp_kernel(%arg0: i32, %arg1: memref<128x8xf32, #tpu.memory_space<vmem>>, %arg2: memref<64x8xf32, #tpu.memory_space<vmem>>, %arg3: memref<64x1xf32, #tpu.memory_space<vmem>>, %arg4: memref<32x64xf32, #tpu.memory_space<vmem>>, %arg5: memref<32x1xf32, #tpu.memory_space<vmem>>, %arg6: memref<1x32xf32, #tpu.memory_space<vmem>>, %arg7: memref<1x1xf32, #tpu.memory_space<smem>>, %arg8: memref<1x128xf32, #tpu.memory_space<vmem>>) attributes {dimension_semantics = [#tpu.dimension_semantics<parallel>], iteration_bounds = array<i64: 1>, scalar_prefetch = 0 : i64, scratch_operands = 0 : i64, tpu.core_type = #tpu.core_type<tc>, window_params = [{transform_indices = @transform_0, window_bounds = array<i64: 128, 8>}, {pipeline_mode = #tpu.pipeline_mode<synchronous>, transform_indices = @transform_1, window_bounds = array<i64: 64, 8>}, {pipeline_mode = #tpu.pipeline_mode<synchronous>, transform_indices = @transform_2, window_bounds = array<i64: 64, 1>}, {pipeline_mode = #tpu.pipeline_mode<synchronous>, transform_indices = @transform_3, window_bounds = array<i64: 32, 64>}, {pipeline_mode = #tpu.pipeline_mode<synchronous>, transform_indices = @transform_4, window_bounds = array<i64: 32, 1>}, {pipeline_mode = #tpu.pipeline_mode<synchronous>, transform_indices = @transform_5, window_bounds = array<i64: 1, 32>}, {transform_indices = @transform_6, window_bounds = array<i64: 1, 1>}, {transform_indices = @transform_7, window_bounds = array<i64: 1, 128>}]} {
    %c0 = arith.constant 0 : index
    %c0_0 = arith.constant 0 : index
    %0 = vector.load %arg1[%c0, %c0_0] : memref<128x8xf32, #tpu.memory_space<vmem>>, vector<128x8xf32>
    %c0_1 = arith.constant 0 : index
    %c0_2 = arith.constant 0 : index
    %1 = vector.load %arg2[%c0_1, %c0_2] : memref<64x8xf32, #tpu.memory_space<vmem>>, vector<64x8xf32>
    %cst = arith.constant dense<0.000000e+00> : vector<64x128xf32>
    %2 = tpu.matmul %1, %0, %cst {dimension_numbers = #tpu.dot_dimension_numbers<[1], [1], [0], [0], [0, 0, 1, 0], [], []>} : vector<64x8xf32>, vector<128x8xf32>, vector<64x128xf32> -> vector<64x128xf32>
    %c0_3 = arith.constant 0 : index
    %c0_4 = arith.constant 0 : index
    %3 = vector.load %arg3[%c0_3, %c0_4] : memref<64x1xf32, #tpu.memory_space<vmem>>, vector<64x1xf32>
    %4 = vector.broadcast %3 : vector<64x1xf32> to vector<64x128xf32>
    %5 = arith.addf %2, %4 : vector<64x128xf32>
    %cst_5 = arith.constant 0.000000e+00 : f32
    %6 = vector.broadcast %cst_5 : f32 to vector<64x128xf32>
    %7 = arith.maximumf %5, %6 : vector<64x128xf32>
    %c0_6 = arith.constant 0 : index
    %c0_7 = arith.constant 0 : index
    %8 = vector.load %arg4[%c0_6, %c0_7] : memref<32x64xf32, #tpu.memory_space<vmem>>, vector<32x64xf32>
    %cst_8 = arith.constant dense<0.000000e+00> : vector<32x128xf32>
    %9 = tpu.matmul %8, %7, %cst_8 {dimension_numbers = #tpu.dot_dimension_numbers<[1], [0], [0], [1], [0, 0, 1, 1], [], []>} : vector<32x64xf32>, vector<64x128xf32>, vector<32x128xf32> -> vector<32x128xf32>
    %c0_9 = arith.constant 0 : index
    %c0_10 = arith.constant 0 : index
    %10 = vector.load %arg5[%c0_9, %c0_10] : memref<32x1xf32, #tpu.memory_space<vmem>>, vector<32x1xf32>
    %11 = vector.broadcast %10 : vector<32x1xf32> to vector<32x128xf32>
    %12 = arith.addf %9, %11 : vector<32x128xf32>
    %cst_11 = arith.constant 0.000000e+00 : f32
    %13 = vector.broadcast %cst_11 : f32 to vector<32x128xf32>
    %14 = arith.maximumf %12, %13 : vector<32x128xf32>
    %c0_12 = arith.constant 0 : index
    %c0_13 = arith.constant 0 : index
    %15 = vector.load %arg6[%c0_12, %c0_13] : memref<1x32xf32, #tpu.memory_space<vmem>>, vector<1x32xf32>
    %cst_14 = arith.constant dense<0.000000e+00> : vector<1x128xf32>
    %16 = tpu.matmul %15, %14, %cst_14 {dimension_numbers = #tpu.dot_dimension_numbers<[1], [0], [0], [1], [0, 0, 1, 1], [], []>} : vector<1x32xf32>, vector<32x128xf32>, vector<1x128xf32> -> vector<1x128xf32>
    %c0_15 = arith.constant 0 : index
    %c0_16 = arith.constant 0 : index
    %17 = memref.load %arg7[%c0_15, %c0_16] : memref<1x1xf32, #tpu.memory_space<smem>>
    %18 = vector.broadcast %17 : f32 to vector<1x128xf32>
    %19 = arith.addf %16, %18 : vector<1x128xf32>
    %c0_17 = arith.constant 0 : index
    %c0_18 = arith.constant 0 : index
    %20 = vector.load %arg8[%c0_17, %c0_18] : memref<1x128xf32, #tpu.memory_space<vmem>>, vector<1x128xf32>
    tpu.vector_store %arg8[%c0_17, %c0_18], %19 {strides = array<i32>} : memref<1x128xf32, #tpu.memory_space<vmem>>, vector<1x128xf32>,
    return
  }
  func.func @transform_0(%arg0: i32) -> (i32, i32) {
    %c0_i32 = arith.constant 0 : i32
    %c0_i32_0 = arith.constant 0 : i32
    return %arg0, %c0_i32 : i32, i32
  }
  func.func @transform_1(%arg0: i32) -> (i32, i32) {
    %c0_i32 = arith.constant 0 : i32
    %c0_i32_0 = arith.constant 0 : i32
    %c0_i32_1 = arith.constant 0 : i32
    return %c0_i32, %c0_i32_0 : i32, i32
  }
  func.func @transform_2(%arg0: i32) -> (i32, i32) {
    %c0_i32 = arith.constant 0 : i32
    %c0_i32_0 = arith.constant 0 : i32
    %c0_i32_1 = arith.constant 0 : i32
    return %c0_i32, %c0_i32_0 : i32, i32
  }
  func.func @transform_3(%arg0: i32) -> (i32, i32) {
    %c0_i32 = arith.constant 0 : i32
    %c0_i32_0 = arith.constant 0 : i32
    %c0_i32_1 = arith.constant 0 : i32
    return %c0_i32, %c0_i32_0 : i32, i32
  }
  func.func @transform_4(%arg0: i32) -> (i32, i32) {
    %c0_i32 = arith.constant 0 : i32
    %c0_i32_0 = arith.constant 0 : i32
    %c0_i32_1 = arith.constant 0 : i32
    return %c0_i32, %c0_i32_0 : i32, i32
  }
  func.func @transform_5(%arg0: i32) -> (i32, i32) {
    %c0_i32 = arith.constant 0 : i32
    %c0_i32_0 = arith.constant 0 : i32
    %c0_i32_1 = arith.constant 0 : i32
    return %c0_i32, %c0_i32_0 : i32, i32
  }
  func.func @transform_6(%arg0: i32) -> (i32, i32) {
    %c0_i32 = arith.constant 0 : i32
    %c0_i32_0 = arith.constant 0 : i32
    %c0_i32_1 = arith.constant 0 : i32
    return %c0_i32, %c0_i32_0 : i32, i32
  }
  func.func @transform_7(%arg0: i32) -> (i32, i32) {
    %c0_i32 = arith.constant 0 : i32
    %c0_i32_0 = arith.constant 0 : i32
    return %c0_i32, %arg0 : i32, i32
  }
}

</mosaic_0001>

<llo_original>
// kernel: california_housing_forward.1
$region0: #{california_housing_forward.1}
  #allocation0 [shape = 'u32[]', space=smem, size = 0x4, offset = 0x4, fixed_abs, tag = 'smem constant byte address 0x4 - core index']
  #allocation1 [shape = 'u32[72,128]{1,0:T(1,128)}', space=vmem, size = 0x9000, scoped, tag = 'internal scratch']
  #allocation2 [shape = 'f32[1,1]{1,0:T(1,128)S(6)}', space=smem, size = 0x200, scoped, tag = 'scoped memory for california_housing_forward.1']
  %s0 = inlined_call_operand.vmem [shape: f32[128,8], index: 0, kind: input, shape index: {}]
  %s1 = inlined_call_operand.vmem [shape: f32[64,8], index: 1, kind: input, shape index: {}]
  %s2 = inlined_call_operand.vmem [shape: f32[64,1], index: 2, kind: input, shape index: {}]
  %s3 = inlined_call_operand.vmem [shape: f32[32,64], index: 3, kind: input, shape index: {}]
  %s4 = inlined_call_operand.vmem [shape: f32[32,1], index: 4, kind: input, shape index: {}]
  %s5 = inlined_call_operand.vmem [shape: f32[1,32], index: 5, kind: input, shape index: {}]
  %s6 = inlined_call_operand.<no memory space> [shape: f32[1,1], index: 6, kind: input, shape index: {}]
  %s7 = inlined_call_operand.vmem [shape: f32[1,128], index: 7, kind: output, shape index: {}]
  %s8 = sld [smem:[#allocation0]]
  $region38: #{california_housing_forward.1} parent=0
    _
  %s10 = ssub.s32 1, %s8
  %s11 = scalar_select 0, %s10, %s8
  %12 = sst [smem:[#allocation2]] %s6
  // Predicated region
  $region2: #{california_housing_forward.1} parent=0 // pred_check
    _
  $region3: #{california_housing_forward.1} parent=0 // pred_check_branch
    %14 = sbr.rel (0) target = $region5
  $region4: #{california_housing_forward.1} parent=0 // pred_region
    _
  $region5: #{california_housing_forward.1} parent=0 // pred_fallthru
    _
  // Predicated region
  $region6: #{california_housing_forward.1} parent=0 // pred_check
    _
  $region7: #{california_housing_forward.1} parent=0 // pred_check_branch
    %16 = sbr.rel (0) target = $region9
  $region8: #{california_housing_forward.1} parent=0 // pred_region
    _
  $region9: #{california_housing_forward.1} parent=0 // pred_fallthru
    _
  // Predicated region
  $region10: #{california_housing_forward.1} parent=0 // pred_check
    _
  $region11: #{california_housing_forward.1} parent=0 // pred_check_branch
    %18 = sbr.rel (0) target = $region13
  $region12: #{california_housing_forward.1} parent=0 // pred_region
    _
  $region13: #{california_housing_forward.1} parent=0 // pred_fallthru
    _
  // Predicated region
  $region14: #{california_housing_forward.1} parent=0 // pred_check
    _
  $region15: #{california_housing_forward.1} parent=0 // pred_check_branch
    %20 = sbr.rel (0) target = $region17
  $region16: #{california_housing_forward.1} parent=0 // pred_region
    _
  $region17: #{california_housing_forward.1} parent=0 // pred_fallthru
    _
  // Predicated region
  $region18: #{california_housing_forward.1} parent=0 // pred_check
    _
  $region19: #{california_housing_forward.1} parent=0 // pred_check_branch
    %22 = sbr.rel (0) target = $region21
  $region20: #{california_housing_forward.1} parent=0 // pred_region
    _
  $region21: #{california_housing_forward.1} parent=0 // pred_fallthru
    _
  // Predicated region
  $region22: #{california_housing_forward.1} parent=0 // pred_check
    _
  $region23: #{california_housing_forward.1} parent=0 // pred_check_branch
    %24 = sbr.rel (0) target = $region25
  $region24: #{california_housing_forward.1} parent=0 // pred_region
    _
  $region25: #{california_housing_forward.1} parent=0 // pred_fallthru
    _
  // Predicated region
  $region26: #{california_housing_forward.1} parent=0 // pred_check
    _
  $region27: #{california_housing_forward.1} parent=0 // pred_check_branch
    %26 = sbr.rel (0) target = $region29
  $region28: #{california_housing_forward.1} parent=0 // pred_region
    _
  $region29: #{california_housing_forward.1} parent=0 // pred_fallthru
    _
  %v27 = vld [vmem:[%s0] sm:$0xff]
  %v28 = vld [vmem:[%s0 + $0x8] sm:$0xff]
  %v29 = vld [vmem:[%s0 + $0x10] sm:$0xff]
  %v30 = vld [vmem:[%s0 + $0x18] sm:$0xff]
  %v31 = vld [vmem:[%s0 + $0x20] sm:$0xff]
  %v32 = vld [vmem:[%s0 + $0x28] sm:$0xff]
  %v33 = vld [vmem:[%s0 + $0x30] sm:$0xff]
  %v34 = vld [vmem:[%s0 + $0x38] sm:$0xff]
  %v35 = vld [vmem:[%s0 + $0x40] sm:$0xff]
  %v36 = vld [vmem:[%s0 + $0x48] sm:$0xff]
  %v37 = vld [vmem:[%s0 + $0x50] sm:$0xff]
  %v38 = vld [vmem:[%s0 + $0x58] sm:$0xff]
  %v39 = vld [vmem:[%s0 + $0x60] sm:$0xff]
  %v40 = vld [vmem:[%s0 + $0x68] sm:$0xff]
  %v41 = vld [vmem:[%s0 + $0x70] sm:$0xff]
  %v42 = vld [vmem:[%s0 + $0x78] sm:$0xff]
  %v43 = vld [vmem:[%s1] sm:$0xff]
  %v44 = vld [vmem:[%s1 + $0x8] sm:$0xff]
  %v45 = vld [vmem:[%s1 + $0x10] sm:$0xff]
  %v46 = vld [vmem:[%s1 + $0x18] sm:$0xff]
  %v47 = vld [vmem:[%s1 + $0x20] sm:$0xff]
  %v48 = vld [vmem:[%s1 + $0x28] sm:$0xff]
  %v49 = vld [vmem:[%s1 + $0x30] sm:$0xff]
  %v50 = vld [vmem:[%s1 + $0x38] sm:$0xff]
  %v51 = vld [vmem:[%s2] sm:$0xff]
  %v52 = vld [vmem:[%s2 + $0x8] sm:$0xff]
  %v53 = vld [vmem:[%s2 + $0x10] sm:$0xff]
  %v54 = vld [vmem:[%s2 + $0x18] sm:$0xff]
  %v55 = vld [vmem:[%s2 + $0x20] sm:$0xff]
  %v56 = vld [vmem:[%s2 + $0x28] sm:$0xff]
  %v57 = vld [vmem:[%s2 + $0x30] sm:$0xff]
  %v58 = vld [vmem:[%s2 + $0x38] sm:$0xff]
  %60 = vset.pattern.permute.xlu0 0
  %61 = vperm.xlu0 %60, %v51
  %v62 = vpop.permute.xlu0 %61
  %65 = vset.pattern.permute.xlu0 0
  %66 = vperm.xlu0 %65, %v52
  %v67 = vpop.permute.xlu0 %66
  %70 = vset.pattern.permute.xlu0 0
  %71 = vperm.xlu0 %70, %v53
  %v72 = vpop.permute.xlu0 %71
  %75 = vset.pattern.permute.xlu0 0
  %76 = vperm.xlu0 %75, %v54
  %v77 = vpop.permute.xlu0 %76
  %80 = vset.pattern.permute.xlu0 0
  %81 = vperm.xlu0 %80, %v55
  %v82 = vpop.permute.xlu0 %81
  %85 = vset.pattern.permute.xlu0 0
  %86 = vperm.xlu0 %85, %v56
  %v87 = vpop.permute.xlu0 %86
  %90 = vset.pattern.permute.xlu0 0
  %91 = vperm.xlu0 %90, %v57
  %v92 = vpop.permute.xlu0 %91
  %95 = vset.pattern.permute.xlu0 0
  %96 = vperm.xlu0 %95, %v58
  %v97 = vpop.permute.xlu0 %96
  %vm99 = vcmask 64512
  %v101 = vsel %vm99, %v43, 0
  %v104 = vsel %vm99, %v44, 0
  %v107 = vsel %vm99, %v45, 0
  %v110 = vsel %vm99, %v46, 0
  %v113 = vsel %vm99, %v47, 0
  %v116 = vsel %vm99, %v48, 0
  %v119 = vsel %vm99, %v49, 0
  %v122 = vsel %vm99, %v50, 0
  %v125 = vsel %vm99, %v27, 0
  %v128 = vsel %vm99, %v28, 0
  %v131 = vsel %vm99, %v29, 0
  %v134 = vsel %vm99, %v30, 0
  %v137 = vsel %vm99, %v31, 0
  %v140 = vsel %vm99, %v32, 0
  %v143 = vsel %vm99, %v33, 0
  %v146 = vsel %vm99, %v34, 0
  %v149 = vsel %vm99, %v35, 0
  %v152 = vsel %vm99, %v36, 0
  %v155 = vsel %vm99, %v37, 0
  %v158 = vsel %vm99, %v38, 0
  %v161 = vsel %vm99, %v39, 0
  %v164 = vsel %vm99, %v40, 0
  %v167 = vsel %vm99, %v41, 0
  %v170 = vsel %vm99, %v42, 0
  %172 = vmatpush.xpose.msra.mxu0 %v170
  %173 = vmatpush.xpose.msra.mxu0 %v167
  %174 = vmatpush.xpose.msra.mxu0 %v164
  %175 = vmatpush.xpose.msra.mxu0 %v161
  %176 = vmatpush.xpose.msra.mxu0 %v158
  %177 = vmatpush.xpose.msra.mxu0 %v155
  %178 = vmatpush.xpose.msra.mxu0 %v152
  %179 = vmatpush.xpose.msra.mxu0 %v149
  %180 = vmatpush.xpose.msra.mxu0 %v146
  %181 = vmatpush.xpose.msra.mxu0 %v143
  %182 = vmatpush.xpose.msra.mxu0 %v140
  %183 = vmatpush.xpose.msra.mxu0 %v137
  %184 = vmatpush.xpose.msra.mxu0 %v134
  %185 = vmatpush.xpose.msra.mxu0 %v131
  %186 = vmatpush.xpose.msra.mxu0 %v128
  %187 = vmatpush.xpose.msra.mxu0 %v125
  %188 = vmatmul.f32.gmra.mxu0 %v101
  %v189 = vpop.f32.mrf.mxu0
  %v190 = vadd.f32 %v62, %v189
  %191 = vmatmul.f32.gmra.mxu0 %v104
  %v192 = vpop.f32.mrf.mxu0
  %v193 = vadd.f32 %v67, %v192
  %194 = vmatmul.f32.gmra.mxu0 %v107
  %v195 = vpop.f32.mrf.mxu0
  %v196 = vadd.f32 %v72, %v195
  %197 = vmatmul.f32.gmra.mxu0 %v110
  %v198 = vpop.f32.mrf.mxu0
  %v199 = vadd.f32 %v77, %v198
  %200 = vmatmul.f32.gmra.mxu0 %v113
  %v201 = vpop.f32.mrf.mxu0
  %v202 = vadd.f32 %v82, %v201
  %203 = vmatmul.f32.gmra.mxu0 %v116
  %v204 = vpop.f32.mrf.mxu0
  %v205 = vadd.f32 %v87, %v204
  %206 = vmatmul.f32.gmra.mxu0 %v119
  %v207 = vpop.f32.mrf.mxu0
  %v208 = vadd.f32 %v92, %v207
  %209 = vmatmul.f32.gmra.mxu0 %v122
  %v210 = vpop.f32.mrf.mxu0
  %v211 = vadd.f32 %v97, %v210
  %212 = vdwg.mxu0
  %v213 = vmax.f32 %v190, 0.0
  %v214 = vmax.f32 %v193, 0.0
  %v215 = vmax.f32 %v196, 0.0
  %v216 = vmax.f32 %v199, 0.0
  %v217 = vmax.f32 %v202, 0.0
  %v218 = vmax.f32 %v205, 0.0
  %v219 = vmax.f32 %v208, 0.0
  %v220 = vmax.f32 %v211, 0.0
  %v221 = vld [vmem:[%s3] sm:$0xff]
  %v222 = vld [vmem:[%s3 + $0x8] sm:$0xff]
  %v223 = vld [vmem:[%s3 + $0x10] sm:$0xff]
  %v224 = vld [vmem:[%s3 + $0x18] sm:$0xff]
  %v225 = vld [vmem:[%s4] sm:$0xff]
  %v226 = vld [vmem:[%s4 + $0x8] sm:$0xff]
  %v227 = vld [vmem:[%s4 + $0x10] sm:$0xff]
  %v228 = vld [vmem:[%s4 + $0x18] sm:$0xff]
  %230 = vset.pattern.permute.xlu0 0
  %231 = vperm.xlu0 %230, %v225
  %v232 = vpop.permute.xlu0 %231
  %235 = vset.pattern.permute.xlu0 0
  %236 = vperm.xlu0 %235, %v226
  %v237 = vpop.permute.xlu0 %236
  %240 = vset.pattern.permute.xlu0 0
  %241 = vperm.xlu0 %240, %v227
  %v242 = vpop.permute.xlu0 %241
  %245 = vset.pattern.permute.xlu0 0
  %246 = vperm.xlu0 %245, %v228
  %v247 = vpop.permute.xlu0 %246
  %vm249 = vcmask 523264
  %v251 = vsel %vm249, %v221, 0
  %v254 = vsel %vm249, %v222, 0
  %v257 = vsel %vm249, %v223, 0
  %v260 = vsel %vm249, %v224, 0
  %262 = vmatpush.msra.mxu0 0.0
  %263 = vmatpush.msra.mxu0 0.0
  %264 = vmatpush.msra.mxu0 0.0
  %265 = vmatpush.msra.mxu0 0.0
  %266 = vmatpush.msra.mxu0 0.0
  %267 = vmatpush.msra.mxu0 0.0
  %268 = vmatpush.msra.mxu0 0.0
  %269 = vmatpush.msra.mxu0 0.0
  %270 = vmatpush.msra.mxu0 %v220
  %271 = vmatpush.msra.mxu0 %v219
  %272 = vmatpush.msra.mxu0 %v218
  %273 = vmatpush.msra.mxu0 %v217
  %274 = vmatpush.msra.mxu0 %v216
  %275 = vmatpush.msra.mxu0 %v215
  %276 = vmatpush.msra.mxu0 %v214
  %277 = vmatpush.msra.mxu0 %v213
  %278 = vmatmul.f32.gmra.mxu0 %v251
  %v279 = vpop.f32.mrf.mxu0
  %v280 = vadd.f32 %v232, %v279
  %281 = vmatmul.f32.gmra.mxu0 %v254
  %v282 = vpop.f32.mrf.mxu0
  %v283 = vadd.f32 %v237, %v282
  %284 = vmatmul.f32.gmra.mxu0 %v257
  %v285 = vpop.f32.mrf.mxu0
  %v286 = vadd.f32 %v242, %v285
  %287 = vmatmul.f32.gmra.mxu0 %v260
  %v288 = vpop.f32.mrf.mxu0
  %v289 = vadd.f32 %v247, %v288
  %290 = vdwg.mxu0
  %v291 = vmax.f32 %v280, 0.0
  %v292 = vmax.f32 %v283, 0.0
  %v293 = vmax.f32 %v286, 0.0
  %v294 = vmax.f32 %v289, 0.0
  %v295 = vld [vmem:[%s5] sm:$0x1]
  %s296 = sld [smem:[#allocation2]]
  %v297 = vstv %s296
  %vm298 = vcmask 261120
  %v300 = vsel %vm298, %v295, 0
  %302 = vmatpush.msra.mxu0 0.0
  %303 = vmatpush.msra.mxu0 0.0
  %304 = vmatpush.msra.mxu0 0.0
  %305 = vmatpush.msra.mxu0 0.0
  %306 = vmatpush.msra.mxu0 0.0
  %307 = vmatpush.msra.mxu0 0.0
  %308 = vmatpush.msra.mxu0 0.0
  %309 = vmatpush.msra.mxu0 0.0
  %310 = vmatpush.msra.mxu0 0.0
  %311 = vmatpush.msra.mxu0 0.0
  %312 = vmatpush.msra.mxu0 0.0
  %313 = vmatpush.msra.mxu0 0.0
  %314 = vmatpush.msra.mxu0 %v294
  %315 = vmatpush.msra.mxu0 %v293
  %316 = vmatpush.msra.mxu0 %v292
  %317 = vmatpush.msra.mxu0 %v291
  %318 = vmatmul.f32.gmra.mxu0 %v300
  %v319 = vpop.f32.mrf.mxu0
  %v320 = vadd.f32 %v297, %v319
  %321 = vdwg.mxu0
  %322 = vst [vmem:[%s7] sm:$0x1] %v320
  // Predicated region
  $region30: #{california_housing_forward.1} parent=0 // pred_check
    _
  $region31: #{california_housing_forward.1} parent=0 // pred_check_branch
    %324 = sbr.rel (0) target = $region33
  $region32: #{california_housing_forward.1} parent=0 // pred_region
    _
  $region33: #{california_housing_forward.1} parent=0 // pred_fallthru
    _
  // Predicated region
  $region34: #{california_housing_forward.1} parent=0 // pred_check
    _
  $region35: #{california_housing_forward.1} parent=0 // pred_check_branch
    %326 = sbr.rel (0) target = $region37
  $region36: #{california_housing_forward.1} parent=0 // pred_region
    _
  $region37: #{california_housing_forward.1} parent=0 // pred_fallthru
    _

</llo_original>
